<compile_context>
chip_gen: v5e
topology: v5e:2x2
jax: 0.10.0
libtpu: 0.0.40
codegen_flags: <defaults>
</compile_context>

<pallas_src>
import functools
import math

import jax
import jax.numpy as jnp
import numpy as np
from jax.experimental import pallas as pl
from jax.experimental.pallas import tpu as pltpu


def _round_up(x, m):
    return ((x + m - 1) // m) * m


# ------------------------------ Pallas kernel -------------------------------

def _make_encoder_kernel(num_fc, latent_dims):
    """Fused kernel for one TM-row batch tile.

    Ref order: x, w0, b0, ..., w{n-1}, b{n-1}, w_head, out
      out[:, :L]    = mu
      out[:, L:2L]  = std = exp(0.5 * hardtanh(log_var, -6, 2))
      out[:, 2L:]   = lane padding (zeros, sliced off in the wrapper)
    """

    def kernel(x_ref, *refs):
        out_ref = refs[-1]
        w_head_ref = refs[-2]

        a = x_ref[...]                                   # f32 activations
        for i in range(num_fc):
            w = refs[2 * i][...]                         # bf16 weights
            b = refs[2 * i + 1][...]                     # f32 bias (1, H)
            a = jnp.maximum(
                jnp.dot(a.astype(w.dtype), w,
                        preferred_element_type=jnp.float32) + b,
                0.0)

        # One wide, lane-dense head matmul: [W_mu | W_logvar | 0-pad].
        w_head = w_head_ref[...]
        y = jnp.dot(a.astype(w_head.dtype), w_head,
                    preferred_element_type=jnp.float32)

        # Apply hardtanh(-6, 2) + exp(0.5*.) only to the log_var lanes via a
        # lane mask (no narrow slices / concats inside the kernel).
        cols = jax.lax.broadcasted_iota(jnp.int32, y.shape, 1)
        is_logvar = jnp.logical_and(cols >= latent_dims,
                                    cols < 2 * latent_dims)
        std_branch = jnp.exp(0.5 * jnp.clip(y, -6.0, 2.0))
        out_ref[...] = jnp.where(is_logvar, std_branch, y)

    return kernel


# --------------------------------- wrapper ----------------------------------

def encoder_forward(kparams, x, latent_dims, *, block_rows=256):
    """x: (B, n_dims) -> (mu, std), each (B, latent_dims)."""
    fc = kparams["fc"]                       # [(W (in,out) bf16, b (1,out) f32)]
    w_head = kparams["w_head"]               # (h_pad, out_pad) bf16
    out_pad = w_head.shape[1]

    B, K = x.shape
    tm = block_rows if B >= block_rows else _round_up(max(B, 1), 8)
    b_pad = _round_up(B, tm)
    if b_pad != B:
        x = jnp.pad(x, ((0, b_pad - B), (0, 0)))
    grid = (b_pad // tm,)

    flat_args = [x]
    in_specs = [pl.BlockSpec((tm, K), lambda i: (i, 0))]          # batch-tiled
    for w, b in fc:
        flat_args += [w, b]
        in_specs += [pl.BlockSpec(w.shape, lambda i: (0, 0)),     # resident
                     pl.BlockSpec(b.shape, lambda i: (0, 0))]     # resident
    flat_args.append(w_head)
    in_specs.append(pl.BlockSpec(w_head.shape, lambda i: (0, 0))) # resident

    out_specs = pl.BlockSpec((tm, out_pad), lambda i: (i, 0))

    flops = 2 * b_pad * (sum(w.shape[0] * w.shape[1] for w, _ in fc)
                         + w_head.shape[0] * w_head.shape[1])
    weight_bytes = sum(int(w.size) * w.dtype.itemsize
                       + int(b.size) * b.dtype.itemsize for w, b in fc)
    weight_bytes += int(w_head.size) * w_head.dtype.itemsize
    cost = pl.CostEstimate(
        flops=int(flops),
        transcendentals=int(b_pad * out_pad),
        bytes_accessed=int(x.size) * x.dtype.itemsize
                       + b_pad * out_pad * 4 + weight_bytes)

    out = pl.pallas_call(
        _make_encoder_kernel(len(fc), latent_dims),
        out_shape=jax.ShapeDtypeStruct((b_pad, out_pad), jnp.float32),
        grid=grid,
        in_specs=in_specs,
        out_specs=out_specs,
        compiler_params=pltpu.CompilerParams(
            dimension_semantics=("parallel",)),
        cost_estimate=cost,
    )(*flat_args)

    mu = out[:B, :latent_dims]
    std = out[:B, latent_dims:2 * latent_dims]
    return mu, std


# ------------------------------- parameters ---------------------------------

def _uniform(key, shape, fan_in):
    bound = 1.0 / math.sqrt(fan_in)
    return jax.random.uniform(key, shape, jnp.float32, -bound, bound)


def init_params(key, n_dims, latent_dims, h_dim=300, no_layers=1,
                compute_dtype=jnp.bfloat16):
    """Kernel-ready params; ALL per-forward preprocessing is hoisted here.

    * weights stored (in, out) == PyTorch W.T
    * hidden width zero-padded to a multiple of 128 (lane-dense MXU tiles)
    * mu / log_var heads concatenated and zero-padded to a multiple of 128
      output lanes (unmasked stores)
    * matmul weights cast to `compute_dtype` (bf16); biases stay f32.
    Zero padding is exact: padded activations are ReLU(0 + 0) = 0 and padded
    weight rows/cols are 0, so real output columns are unchanged.
    """
    h_pad = _round_up(h_dim, 128)
    out_pad = _round_up(2 * latent_dims, 128)

    fc = []
    dims = [(n_dims, h_dim)] + [(h_dim, h_dim)] * no_layers
    for layer_idx, (din, dout) in enumerate(dims):
        key, kw, kb = jax.random.split(key, 3)
        w = _uniform(kw, (din, dout), din)
        b = _uniform(kb, (1, dout), din)
        din_pad = din if layer_idx == 0 else h_pad
        w_p = jnp.zeros((din_pad, h_pad), jnp.float32).at[:din, :dout].set(w)
        b_p = jnp.zeros((1, h_pad), jnp.float32).at[:, :dout].set(b)
        fc.append((w_p.astype(compute_dtype), b_p))

    key, kmu, klv = jax.random.split(key, 3)
    w_mu = _uniform(kmu, (h_dim, latent_dims), h_dim)      # bias=False
    w_lv = _uniform(klv, (h_dim, latent_dims), h_dim)      # bias=False
    w_head = jnp.zeros((h_pad, out_pad), jnp.float32)
    w_head = w_head.at[:h_dim, :latent_dims].set(w_mu)
    w_head = w_head.at[:h_dim, latent_dims:2 * latent_dims].set(w_lv)

    return {"fc": fc, "w_head": w_head.astype(compute_dtype)}


# ------------------------------ pure-JAX reference ---------------------------

def reference_forward(kparams, x, latent_dims):
    a = x
    for w, b in kparams["fc"]:
        a = jnp.maximum(
            jnp.dot(a.astype(w.dtype), w,
                    preferred_element_type=jnp.float32) + b, 0.0)
    w_head = kparams["w_head"]
    y = jnp.dot(a.astype(w_head.dtype), w_head,
                preferred_element_type=jnp.float32)
    mu = y[:, :latent_dims]
    std = jnp.exp(0.5 * jnp.clip(y[:, latent_dims:2 * latent_dims], -6.0, 2.0))
    return mu, std


# ----------------------------------- main ------------------------------------

if __name__ == "__main__":
    B = 2
    n_dims = 16
    h_dim = 128            # 128-aligned hidden width (perf feedback)
    latent_dims = 8
    no_layers = 1          # module default: first layer + 1 hidden layer

    key = jax.random.PRNGKey(0)
    kp, kx = jax.random.split(key)
    params = init_params(kp, n_dims, latent_dims, h_dim=h_dim,
                         no_layers=no_layers)
    x = jax.random.normal(kx, (B, n_dims), jnp.float32)

    forward = jax.jit(functools.partial(encoder_forward,
                                        latent_dims=latent_dims))
    mu, std = forward(params, x)
    jax.block_until_ready((mu, std))

    # Correctness check against a plain-JAX reference using the same
    # (padded, bf16) weights -> identical math up to accumulation order.
    mu_ref, std_ref = reference_forward(params, x, latent_dims)
    np.testing.assert_allclose(np.asarray(mu), np.asarray(mu_ref),
                               rtol=2e-3, atol=2e-3)
    np.testing.assert_allclose(np.asarray(std), np.asarray(std_ref),
                               rtol=2e-3, atol=2e-3)

    assert mu.shape == (B, latent_dims)
    assert std.shape == (B, latent_dims)
    assert bool(jnp.all(std > 0))
    print("KERNEL_OK")
</pallas_src>

<mosaic_0001>
module attributes {stable_mosaic.version = 11 : i64} {
  func.func @kernel(%arg0: i32, %arg1: memref<8x16xf32, #tpu.memory_space<vmem>>, %arg2: memref<16x128xbf16, #tpu.memory_space<vmem>>, %arg3: memref<1x128xf32, #tpu.memory_space<vmem>>, %arg4: memref<128x128xbf16, #tpu.memory_space<vmem>>, %arg5: memref<1x128xf32, #tpu.memory_space<vmem>>, %arg6: memref<128x128xbf16, #tpu.memory_space<vmem>>, %arg7: memref<8x128xf32, #tpu.memory_space<vmem>>) attributes {dimension_semantics = [#tpu.dimension_semantics<parallel>], iteration_bounds = array<i64: 1>, scalar_prefetch = 0 : i64, scratch_operands = 0 : i64, tpu.core_type = #tpu.core_type<tc>, window_params = [{transform_indices = @transform_0, window_bounds = array<i64: 8, 16>}, {pipeline_mode = #tpu.pipeline_mode<synchronous>, transform_indices = @transform_1, window_bounds = array<i64: 16, 128>}, {pipeline_mode = #tpu.pipeline_mode<synchronous>, transform_indices = @transform_2, window_bounds = array<i64: 1, 128>}, {pipeline_mode = #tpu.pipeline_mode<synchronous>, transform_indices = @transform_3, window_bounds = array<i64: 128, 128>}, {pipeline_mode = #tpu.pipeline_mode<synchronous>, transform_indices = @transform_4, window_bounds = array<i64: 1, 128>}, {pipeline_mode = #tpu.pipeline_mode<synchronous>, transform_indices = @transform_5, window_bounds = array<i64: 128, 128>}, {transform_indices = @transform_6, window_bounds = array<i64: 8, 128>}]} {
    %c0 = arith.constant 0 : index
    %c0_0 = arith.constant 0 : index
    %0 = vector.load %arg1[%c0, %c0_0] : memref<8x16xf32, #tpu.memory_space<vmem>>, vector<8x16xf32>
    %c0_1 = arith.constant 0 : index
    %c0_2 = arith.constant 0 : index
    %1 = vector.load %arg2[%c0_1, %c0_2] : memref<16x128xbf16, #tpu.memory_space<vmem>>, vector<16x128xbf16>
    %c0_3 = arith.constant 0 : index
    %c0_4 = arith.constant 0 : index
    %2 = vector.load %arg3[%c0_3, %c0_4] : memref<1x128xf32, #tpu.memory_space<vmem>>, vector<1x128xf32>
    %3 = arith.truncf %0 : vector<8x16xf32> to vector<8x16xbf16>
    %cst = arith.constant dense<0.000000e+00> : vector<8x128xf32>
    %4 = tpu.matmul %3, %1, %cst {dimension_numbers = #tpu.dot_dimension_numbers<[1], [0], [0], [1], [0, 0, 1, 1], [], []>} : vector<8x16xbf16>, vector<16x128xbf16>, vector<8x128xf32> -> vector<8x128xf32>
    %5 = vector.broadcast %2 : vector<1x128xf32> to vector<8x128xf32>
    %6 = arith.addf %4, %5 : vector<8x128xf32>
    %cst_5 = arith.constant 0.000000e+00 : f32
    %7 = vector.broadcast %cst_5 : f32 to vector<8x128xf32>
    %8 = arith.maximumf %6, %7 : vector<8x128xf32>
    %c0_6 = arith.constant 0 : index
    %c0_7 = arith.constant 0 : index
    %9 = vector.load %arg4[%c0_6, %c0_7] : memref<128x128xbf16, #tpu.memory_space<vmem>>, vector<128x128xbf16>
    %c0_8 = arith.constant 0 : index
    %c0_9 = arith.constant 0 : index
    %10 = vector.load %arg5[%c0_8, %c0_9] : memref<1x128xf32, #tpu.memory_space<vmem>>, vector<1x128xf32>
    %11 = arith.truncf %8 : vector<8x128xf32> to vector<8x128xbf16>
    %cst_10 = arith.constant dense<0.000000e+00> : vector<8x128xf32>
    %12 = tpu.matmul %11, %9, %cst_10 {dimension_numbers = #tpu.dot_dimension_numbers<[1], [0], [0], [1], [0, 0, 1, 1], [], []>} : vector<8x128xbf16>, vector<128x128xbf16>, vector<8x128xf32> -> vector<8x128xf32>
    %13 = vector.broadcast %10 : vector<1x128xf32> to vector<8x128xf32>
    %14 = arith.addf %12, %13 : vector<8x128xf32>
    %cst_11 = arith.constant 0.000000e+00 : f32
    %15 = vector.broadcast %cst_11 : f32 to vector<8x128xf32>
    %16 = arith.maximumf %14, %15 : vector<8x128xf32>
    %c0_12 = arith.constant 0 : index
    %c0_13 = arith.constant 0 : index
    %17 = vector.load %arg6[%c0_12, %c0_13] : memref<128x128xbf16, #tpu.memory_space<vmem>>, vector<128x128xbf16>
    %18 = arith.truncf %16 : vector<8x128xf32> to vector<8x128xbf16>
    %cst_14 = arith.constant dense<0.000000e+00> : vector<8x128xf32>
    %19 = tpu.matmul %18, %17, %cst_14 {dimension_numbers = #tpu.dot_dimension_numbers<[1], [0], [0], [1], [0, 0, 1, 1], [], []>} : vector<8x128xbf16>, vector<128x128xbf16>, vector<8x128xf32> -> vector<8x128xf32>
    %20 = tpu.iota {dimensions = array<i32: 1>} : vector<8x128xi32>
    %c8_i32 = arith.constant 8 : i32
    %21 = vector.broadcast %c8_i32 : i32 to vector<8x128xi32>
    %22 = arith.cmpi sge, %20, %21 : vector<8x128xi32>
    %c16_i32 = arith.constant 16 : i32
    %23 = vector.broadcast %c16_i32 : i32 to vector<8x128xi32>
    %24 = arith.cmpi slt, %20, %23 : vector<8x128xi32>
    %25 = arith.andi %22, %24 : vector<8x128xi1>
    %cst_15 = arith.constant -6.000000e+00 : f32
    %cst_16 = arith.constant 2.000000e+00 : f32
    %26 = vector.broadcast %cst_15 : f32 to vector<8x128xf32>
    %27 = arith.maximumf %26, %19 : vector<8x128xf32>
    %28 = vector.broadcast %cst_16 : f32 to vector<8x128xf32>
    %29 = arith.minimumf %28, %27 : vector<8x128xf32>
    %cst_17 = arith.constant 5.000000e-01 : f32
    %30 = vector.broadcast %cst_17 : f32 to vector<8x128xf32>
    %31 = arith.mulf %30, %29 : vector<8x128xf32>
    %32 = math.exp %31 : vector<8x128xf32>
    %33 = arith.select %25, %32, %19 : vector<8x128xi1>, vector<8x128xf32>
    %c0_18 = arith.constant 0 : index
    %c0_19 = arith.constant 0 : index
    %34 = vector.load %arg7[%c0_18, %c0_19] : memref<8x128xf32, #tpu.memory_space<vmem>>, vector<8x128xf32>
    tpu.vector_store %arg7[%c0_18, %c0_19], %33 {strides = array<i32>} : memref<8x128xf32, #tpu.memory_space<vmem>>, vector<8x128xf32>,
    return
  }
  func.func @transform_0(%arg0: i32) -> (i32, i32) {
    %c0_i32 = arith.constant 0 : i32
    %c0_i32_0 = arith.constant 0 : i32
    return %arg0, %c0_i32 : i32, i32
  }
  func.func @transform_1(%arg0: i32) -> (i32, i32) {
    %c0_i32 = arith.constant 0 : i32
    %c0_i32_0 = arith.constant 0 : i32
    %c0_i32_1 = arith.constant 0 : i32
    return %c0_i32, %c0_i32_0 : i32, i32
  }
  func.func @transform_2(%arg0: i32) -> (i32, i32) {
    %c0_i32 = arith.constant 0 : i32
    %c0_i32_0 = arith.constant 0 : i32
    %c0_i32_1 = arith.constant 0 : i32
    return %c0_i32, %c0_i32_0 : i32, i32
  }
  func.func @transform_3(%arg0: i32) -> (i32, i32) {
    %c0_i32 = arith.constant 0 : i32
    %c0_i32_0 = arith.constant 0 : i32
    %c0_i32_1 = arith.constant 0 : i32
    return %c0_i32, %c0_i32_0 : i32, i32
  }
  func.func @transform_4(%arg0: i32) -> (i32, i32) {
    %c0_i32 = arith.constant 0 : i32
    %c0_i32_0 = arith.constant 0 : i32
    %c0_i32_1 = arith.constant 0 : i32
    return %c0_i32, %c0_i32_0 : i32, i32
  }
  func.func @transform_5(%arg0: i32) -> (i32, i32) {
    %c0_i32 = arith.constant 0 : i32
    %c0_i32_0 = arith.constant 0 : i32
    %c0_i32_1 = arith.constant 0 : i32
    return %c0_i32, %c0_i32_0 : i32, i32
  }
  func.func @transform_6(%arg0: i32) -> (i32, i32) {
    %c0_i32 = arith.constant 0 : i32
    %c0_i32_0 = arith.constant 0 : i32
    return %arg0, %c0_i32 : i32, i32
  }
}

</mosaic_0001>

<llo_original>
// kernel: encoder_forward.1
$region0: #{encoder_forward.1}
  #allocation0 [shape = 'u32[]', space=smem, size = 0x4, offset = 0x4, fixed_abs, tag = 'smem constant byte address 0x4 - core index']
  #allocation1 [shape = 'u32[72,128]{1,0:T(1,128)}', space=vmem, size = 0x9000, scoped, tag = 'internal scratch']
  %s0 = inlined_call_operand.vmem [shape: f32[8,16], index: 0, kind: input, shape index: {}]
  %s1 = inlined_call_operand.vmem [shape: bf16[16,128], index: 1, kind: input, shape index: {}]
  %s2 = inlined_call_operand.vmem [shape: f32[1,128], index: 2, kind: input, shape index: {}]
  %s3 = inlined_call_operand.hbm [shape: bf16[128,128], index: 3, kind: input, shape index: {}]
  %s4 = inlined_call_operand.vmem [shape: f32[1,128], index: 4, kind: input, shape index: {}]
  %s5 = inlined_call_operand.hbm [shape: bf16[128,128], index: 5, kind: input, shape index: {}]
  %s6 = inlined_call_operand.vmem [shape: f32[8,128], index: 6, kind: output, shape index: {}]
  %s7 = sld [smem:[#allocation0]]
  $region42: #{encoder_forward.1} parent=0
    _
  %s9 = ssub.s32 1, %s7
  %s10 = scalar_select 0, %s9, %s7
  $region1: #{encoder_forward.1} parent=0
    #allocation2 [shape = 'u8[32768]{0}', space=vmem, size = 0x8000, scoped, tag = 'input window, operand 3, single buffered']
    #allocation3 [shape = 's32[1]{0}', space=sflag, size = 0x4, scoped, tag = 'scoped memory for encoder_forward.1']
    #allocation4 [shape = 'u8[32768]{0}', space=vmem, size = 0x8000, scoped, tag = 'input window, operand 5, single buffered']
    #allocation5 [shape = 's32[1]{0}', space=sflag, size = 0x4, scoped, tag = 'scoped memory for encoder_forward.1']
    %11 = vsyncpa [#allocation3], 0
    %12 = vsyncpa [#allocation5], 0
    // Predicated region
    $region2: #{encoder_forward.1} parent=1 // pred_check
      _
    $region3: #{encoder_forward.1} parent=1 // pred_check_branch
      %14 = sbr.rel (0) target = $region5
    $region4: #{encoder_forward.1} parent=1 // pred_region
      _
    $region5: #{encoder_forward.1} parent=1 // pred_fallthru
      _
    // Predicated region
    $region6: #{encoder_forward.1} parent=1 // pred_check
      _
    $region7: #{encoder_forward.1} parent=1 // pred_check_branch
      %16 = sbr.rel (0) target = $region9
    $region8: #{encoder_forward.1} parent=1 // pred_region
      _
    $region9: #{encoder_forward.1} parent=1 // pred_fallthru
      _
    // Predicated region
    $region10: #{encoder_forward.1} parent=1 // pred_check
      _
    $region11: #{encoder_forward.1} parent=1 // pred_check_branch
      %18 = sbr.rel (0) target = $region13
    $region12: #{encoder_forward.1} parent=1 // pred_region
      _
    $region13: #{encoder_forward.1} parent=1 // pred_fallthru
      _
    // Predicated region
    $region14: #{encoder_forward.1} parent=1 // pred_check
      _
    $region15: #{encoder_forward.1} parent=1 // pred_check_branch
      %20 = sbr.rel (0) target = $region17
    $region16: #{encoder_forward.1} parent=1 // pred_region
      %22 = vsyncadd [#allocation3], 0
      %s23 = sshll.u32 %s3, 4
      %s24 = int_to_ptr.hbm [resolvable:$true] %s23
      %s25 = sshll.u32 [#allocation2], 4
      %s26 = int_to_ptr.vmem [resolvable:$true] %s25
      %31 = dma.hbm_to_vmem [thread:$0]  %s24, 1024, %s26, [#allocation3], 64, 64, 4
    $region17: #{encoder_forward.1} parent=1 // pred_fallthru
      _
    // Predicated region
    $region18: #{encoder_forward.1} parent=1 // pred_check
      _
    $region19: #{encoder_forward.1} parent=1 // pred_check_branch
      %33 = sbr.rel (0) target = $region21
    $region20: #{encoder_forward.1} parent=1 // pred_region
      _
    $region21: #{encoder_forward.1} parent=1 // pred_fallthru
      _
    // Predicated region
    $region22: #{encoder_forward.1} parent=1 // pred_check
      _
    $region23: #{encoder_forward.1} parent=1 // pred_check_branch
      %35 = sbr.rel (0) target = $region25
    $region24: #{encoder_forward.1} parent=1 // pred_region
      %37 = vsyncadd [#allocation5], 0
      %s38 = sshll.u32 %s5, 4
      %s39 = int_to_ptr.hbm [resolvable:$true] %s38
      %s40 = sshll.u32 [#allocation4], 4
      %s41 = int_to_ptr.vmem [resolvable:$true] %s40
      %46 = dma.hbm_to_vmem [thread:$0]  %s39, 1024, %s41, [#allocation5], 64, 64, 4
    $region25: #{encoder_forward.1} parent=1 // pred_fallthru
      _
    // Predicated region
    $region26: #{encoder_forward.1} parent=1 // pred_check
      _
    $region27: #{encoder_forward.1} parent=1 // pred_check_branch
      %48 = sbr.rel (0) target = $region29
    $region28: #{encoder_forward.1} parent=1 // pred_region
      %50 = dma.done [#allocation3], 1024
    $region29: #{encoder_forward.1} parent=1 // pred_fallthru
      _
    // Predicated region
    $region30: #{encoder_forward.1} parent=1 // pred_check
      _
    $region31: #{encoder_forward.1} parent=1 // pred_check_branch
      %52 = sbr.rel (0) target = $region33
    $region32: #{encoder_forward.1} parent=1 // pred_region
      %54 = dma.done [#allocation5], 1024
    $region33: #{encoder_forward.1} parent=1 // pred_fallthru
      _
    %v56 = vld [vmem:[%s0] sm:$0xff]
    %v57 = vld [vmem:[%s1] sm:$0xf]
    %v58 = vld [vmem:[%s1 + $0x4] sm:$0xf]
    %v59 = vld [vmem:[%s2] sm:$0x1]
    %v60 = vpack.c.bf16 %v56, %v56
    %v62 = vperm.slane %v59, 0
    %v66 = vunpack.c.l.b16 %v57
    %v67 = vunpack.c.l.b16 %v58
    %v68 = vpack.c.b16 %v67, %v66
    %vm70 = vcmask 130048
    %v72 = vsel %vm70, %v60, 0
    %74 = vmatpush.bf16.msra.mxu0 0
    %75 = vmatpush.bf16.msra.mxu0 0
    %76 = vmatpush.bf16.msra.mxu0 0
    %77 = vmatpush.bf16.msra.mxu0 0
    %78 = vmatpush.bf16.msra.mxu0 0
    %79 = vmatpush.bf16.msra.mxu0 0
    %80 = vmatpush.bf16.msra.mxu0 0
    %81 = vmatpush.bf16.msra.mxu0 %v68
    %82 = vmatmul.bf16.gmra.mxu0 %v72
    %v83 = vpop.f32.mrf.mxu0
    %v84 = vadd.f32 %v62, %v83
    %v85 = vpop.f32.mrf.mxu0
    %86 = vdwg.mxu0
    %v87 = vmax.f32 %v84, 0.0
    %v88 = vld [vmem:[#allocation2] sm:$0xf]
    %v89 = vld [vmem:[#allocation2 + $0x4] sm:$0xf]
    %v90 = vld [vmem:[#allocation2 + $0x8] sm:$0xf]
    %v91 = vld [vmem:[#allocation2 + $0xc] sm:$0xf]
    %v92 = vld [vmem:[#allocation2 + $0x10] sm:$0xf]
    %v93 = vld [vmem:[#allocation2 + $0x14] sm:$0xf]
    %v94 = vld [vmem:[#allocation2 + $0x18] sm:$0xf]
    %v95 = vld [vmem:[#allocation2 + $0x1c] sm:$0xf]
    %v96 = vld [vmem:[#allocation2 + $0x20] sm:$0xf]
    %v97 = vld [vmem:[#allocation2 + $0x24] sm:$0xf]
    %v98 = vld [vmem:[#allocation2 + $0x28] sm:$0xf]
    %v99 = vld [vmem:[#allocation2 + $0x2c] sm:$0xf]
    %v100 = vld [vmem:[#allocation2 + $0x30] sm:$0xf]
    %v101 = vld [vmem:[#allocation2 + $0x34] sm:$0xf]
    %v102 = vld [vmem:[#allocation2 + $0x38] sm:$0xf]
    %v103 = vld [vmem:[#allocation2 + $0x3c] sm:$0xf]
    %v104 = vld [vmem:[%s4] sm:$0x1]
    %v105 = vpack.c.bf16 %v87, %v87
    %v107 = vperm.slane %v104, 0
    %v125 = vunpack.c.l.b16 %v88
    %v126 = vunpack.c.l.b16 %v89
    %v127 = vunpack.c.l.b16 %v90
    %v128 = vunpack.c.l.b16 %v91
    %v129 = vunpack.c.l.b16 %v92
    %v130 = vunpack.c.l.b16 %v93
    %v131 = vunpack.c.l.b16 %v94
    %v132 = vunpack.c.l.b16 %v95
    %v133 = vunpack.c.l.b16 %v96
    %v134 = vunpack.c.l.b16 %v97
    %v135 = vunpack.c.l.b16 %v98
    %v136 = vunpack.c.l.b16 %v99
    %v137 = vunpack.c.l.b16 %v100
    %v138 = vunpack.c.l.b16 %v101
    %v139 = vunpack.c.l.b16 %v102
    %v140 = vunpack.c.l.b16 %v103
    %v141 = vpack.c.b16 %v126, %v125
    %v142 = vpack.c.b16 %v128, %v127
    %v143 = vpack.c.b16 %v130, %v129
    %v144 = vpack.c.b16 %v132, %v131
    %v145 = vpack.c.b16 %v134, %v133
    %v146 = vpack.c.b16 %v136, %v135
    %v147 = vpack.c.b16 %v138, %v137
    %v148 = vpack.c.b16 %v140, %v139
    %157 = vmatpush.bf16.msra.mxu0 %v148
    %158 = vmatpush.bf16.msra.mxu0 %v147
    %159 = vmatpush.bf16.msra.mxu0 %v146
    %160 = vmatpush.bf16.msra.mxu0 %v145
    %161 = vmatpush.bf16.msra.mxu0 %v144
    %162 = vmatpush.bf16.msra.mxu0 %v143
    %163 = vmatpush.bf16.msra.mxu0 %v142
    %164 = vmatpush.bf16.msra.mxu0 %v141
    %165 = vmatmul.bf16.gmra.mxu0 %v105
    %v166 = vpop.f32.mrf.mxu0
    %v167 = vadd.f32 %v107, %v166
    %v168 = vpop.f32.mrf.mxu0
    %169 = vdwg.mxu0
    %v170 = vmax.f32 %v167, 0.0
    %v171 = vld [vmem:[#allocation4] sm:$0xf]
    %v172 = vld [vmem:[#allocation4 + $0x4] sm:$0xf]
    %v173 = vld [vmem:[#allocation4 + $0x8] sm:$0xf]
    %v174 = vld [vmem:[#allocation4 + $0xc] sm:$0xf]
    %v175 = vld [vmem:[#allocation4 + $0x10] sm:$0xf]
    %v176 = vld [vmem:[#allocation4 + $0x14] sm:$0xf]
    %v177 = vld [vmem:[#allocation4 + $0x18] sm:$0xf]
    %v178 = vld [vmem:[#allocation4 + $0x1c] sm:$0xf]
    %v179 = vld [vmem:[#allocation4 + $0x20] sm:$0xf]
    %v180 = vld [vmem:[#allocation4 + $0x24] sm:$0xf]
    %v181 = vld [vmem:[#allocation4 + $0x28] sm:$0xf]
    %v182 = vld [vmem:[#allocation4 + $0x2c] sm:$0xf]
    %v183 = vld [vmem:[#allocation4 + $0x30] sm:$0xf]
    %v184 = vld [vmem:[#allocation4 + $0x34] sm:$0xf]
    %v185 = vld [vmem:[#allocation4 + $0x38] sm:$0xf]
    %v186 = vld [vmem:[#allocation4 + $0x3c] sm:$0xf]
    %v187 = vpack.c.bf16 %v170, %v170
    %v204 = vunpack.c.l.b16 %v171
    %v205 = vunpack.c.l.b16 %v172
    %v206 = vunpack.c.l.b16 %v173
    %v207 = vunpack.c.l.b16 %v174
    %v208 = vunpack.c.l.b16 %v175
    %v209 = vunpack.c.l.b16 %v176
    %v210 = vunpack.c.l.b16 %v177
    %v211 = vunpack.c.l.b16 %v178
    %v212 = vunpack.c.l.b16 %v179
    %v213 = vunpack.c.l.b16 %v180
    %v214 = vunpack.c.l.b16 %v181
    %v215 = vunpack.c.l.b16 %v182
    %v216 = vunpack.c.l.b16 %v183
    %v217 = vunpack.c.l.b16 %v184
    %v218 = vunpack.c.l.b16 %v185
    %v219 = vunpack.c.l.b16 %v186
    %v220 = vpack.c.b16 %v205, %v204
    %v221 = vpack.c.b16 %v207, %v206
    %v222 = vpack.c.b16 %v209, %v208
    %v223 = vpack.c.b16 %v211, %v210
    %v224 = vpack.c.b16 %v213, %v212
    %v225 = vpack.c.b16 %v215, %v214
    %v226 = vpack.c.b16 %v217, %v216
    %v227 = vpack.c.b16 %v219, %v218
    %236 = vmatpush.bf16.msra.mxu0 %v227
    %237 = vmatpush.bf16.msra.mxu0 %v226
    %238 = vmatpush.bf16.msra.mxu0 %v225
    %239 = vmatpush.bf16.msra.mxu0 %v224
    %240 = vmatpush.bf16.msra.mxu0 %v223
    %241 = vmatpush.bf16.msra.mxu0 %v222
    %242 = vmatpush.bf16.msra.mxu0 %v221
    %243 = vmatpush.bf16.msra.mxu0 %v220
    %244 = vmatmul.bf16.gmra.mxu0 %v187
    %v245 = vpop.f32.mrf.mxu0
    %v246 = vadd.f32 0.0, %v245
    %v247 = vpop.f32.mrf.mxu0
    %248 = vdwg.mxu0
    %v249 = vlaneseq
    %v250 = vand.u32 %v249, 127
    %vm251 = vcmp.ge.s32.totalorder %v250, 8
    %vm252 = vcmp.lt.s32.totalorder %v250, 16
    %vm253 = vmand %vm251, %vm252
    %v254 = vmax.f32 %v246, -6.0
    %v255 = vmin.f32 %v254, 2.0
    %v256 = vmul.f32 %v255, 0.5
    %v257 = vmul.f32 %v256, 1.442695
    %v258 = vpow.pop %v257
    %v259 = vsel %vm253, %v258, %v246
    %260 = vst [vmem:[%s6] sm:$0xff] %v259
    // Predicated region
    $region34: #{encoder_forward.1} parent=1 // pred_check
      _
    $region35: #{encoder_forward.1} parent=1 // pred_check_branch
      %262 = sbr.rel (0) target = $region37
    $region36: #{encoder_forward.1} parent=1 // pred_region
      _
    $region37: #{encoder_forward.1} parent=1 // pred_fallthru
      _
    // Predicated region
    $region38: #{encoder_forward.1} parent=1 // pred_check
      _
    $region39: #{encoder_forward.1} parent=1 // pred_check_branch
      %264 = sbr.rel (0) target = $region41
    $region40: #{encoder_forward.1} parent=1 // pred_region
      _
    $region41: #{encoder_forward.1} parent=1 // pred_fallthru
      _
    %265 = vsyncpa [#allocation3], 1
    %266 = vsyncpa [#allocation5], 1

</llo_original>
